<compile_context>
chip_gen: v5e
topology: v5e:2x2
jax: 0.10.0
libtpu: 0.0.40
codegen_flags: <defaults>
</compile_context>

<pallas_src>
import functools
import math

import jax
import jax.numpy as jnp
import numpy as np
from jax.experimental import pallas as pl
from jax.experimental.pallas import tpu as pltpu


def _round_up(x: int, m: int) -> int:
    return ((x + m - 1) // m) * m


def _cdiv(a: int, b: int) -> int:
    return -(-a // b)


def _make_kernel(num_layers: int, in_pad: int, gate_pad: int):
    """Fused kernel: num_layers GRU cells (seq_len == 1) + Linear decoder.

    Per-layer fused pre-activation (4 gate slots, each `gate_pad` lanes wide):
        g = x @ Wx + h @ Wh + b,   slots = [r | z | gi_n | gh_n]
    Splitting the x-dot / h-dot avoids materializing a [TN, Ip+Hp] concat buffer
    (pure relayout traffic) while doing identical MXU work; the n-gate's hidden
    term stays in its own slot so the r-multiply matches nn.GRU exactly.
    """
    L, Ip, Hp = num_layers, in_pad, gate_pad

    def body(x_ref, h_ref, w0_ref, wr_ref, b_ref, wd_ref, bd_ref,
             out_ref, hout_ref):
        x = x_ref[...].astype(jnp.bfloat16)                       # [TN, Ip]
        for l in range(L):
            h_prev = h_ref[l].astype(jnp.float32)                 # [TN, Hp]
            h_bf = h_prev.astype(jnp.bfloat16)
            if l == 0:
                wx = w0_ref[0:Ip, :]                               # [Ip, 4*Hp] bf16
                wh = w0_ref[Ip:Ip + Hp, :]                         # [Hp, 4*Hp] bf16
            else:
                wx = wr_ref[l - 1, 0:Hp, :]
                wh = wr_ref[l - 1, Hp:2 * Hp, :]
            g = (jnp.dot(x, wx, preferred_element_type=jnp.float32)
                 + jnp.dot(h_bf, wh, preferred_element_type=jnp.float32)
                 + b_ref[l])                                        # [TN, 4*Hp] f32
            rz = jax.nn.sigmoid(g[:, 0:2 * Hp])                     # one EUP pass (r & z)
            r = rz[:, 0:Hp]
            z = rz[:, Hp:2 * Hp]
            n = jnp.tanh(g[:, 2 * Hp:3 * Hp] + r * g[:, 3 * Hp:4 * Hp])
            h_new = (1.0 - z) * n + z * h_prev
            hout_ref[l] = h_new.astype(hout_ref.dtype)             # lane-dense store
            x = h_new.astype(jnp.bfloat16)                         # next layer's input
        y = (jnp.dot(x, wd_ref[...], preferred_element_type=jnp.float32)
             + bd_ref[...])
        out_ref[...] = y.astype(out_ref.dtype)                     # lane-dense store

    if L > 1:
        return body

    def body_single(x_ref, h_ref, w0_ref, b_ref, wd_ref, bd_ref,
                    out_ref, hout_ref):
        body(x_ref, h_ref, w0_ref, None, b_ref, wd_ref, bd_ref,
             out_ref, hout_ref)

    return body_single


class RecurrentUpdateNetPallas:
    """JAX/Pallas port of RecurrentUpdateNet (final_activation=False branch)."""

    def __init__(self, in_features, latent_dim, out_features, num_layers,
                 key=jax.random.PRNGKey(0), dtype=jnp.float32):
        self.in_features = in_features
        self.latent_dim = latent_dim
        self.out_features = out_features
        self.num_layers = num_layers
        self.dtype = dtype

        self.Ip = _round_up(in_features, 128)   # padded input lanes
        self.Hp = _round_up(latent_dim, 128)    # padded gate/hidden lanes
        self.Op = _round_up(out_features, 128)  # padded decoder output lanes

        # --- raw parameters, PyTorch nn.GRU / nn.Linear layout & init ---------
        bound = 1.0 / math.sqrt(latent_dim)
        keys = jax.random.split(key, 4 * num_layers + 2)
        raw, ki = [], 0
        for l in range(num_layers):
            in_l = in_features if l == 0 else latent_dim
            w_ih = jax.random.uniform(keys[ki], (3 * latent_dim, in_l),
                                      minval=-bound, maxval=bound,
                                      dtype=jnp.float32); ki += 1
            w_hh = jax.random.uniform(keys[ki], (3 * latent_dim, latent_dim),
                                      minval=-bound, maxval=bound,
                                      dtype=jnp.float32); ki += 1
            b_ih = jax.random.uniform(keys[ki], (3 * latent_dim,),
                                      minval=-bound, maxval=bound,
                                      dtype=jnp.float32); ki += 1
            b_hh = jax.random.uniform(keys[ki], (3 * latent_dim,),
                                      minval=-bound, maxval=bound,
                                      dtype=jnp.float32); ki += 1
            raw += [w_ih, w_hh, b_ih, b_hh]
        w_dec = jax.random.uniform(keys[ki], (out_features, latent_dim),
                                   minval=-bound, maxval=bound,
                                   dtype=jnp.float32); ki += 1
        b_dec = jax.random.uniform(keys[ki], (out_features,),
                                   minval=-bound, maxval=bound, dtype=jnp.float32)
        raw += [w_dec, b_dec]
        self.raw = raw

        self._pack_params()
        self._kernel = _make_kernel(num_layers, self.Ip, self.Hp)

    # --- pack raw params into a few lane-aligned bf16/f32 slabs ---------------
    def _pack_params(self):
        H, Hp, Ip, Op = self.latent_dim, self.Hp, self.Ip, self.Op
        L = self.num_layers
        raw = [np.asarray(p, np.float32) for p in self.raw]

        def fuse(w_ih, w_hh, in_l, in_pad):
            # Rows [0:in_pad] multiply x, rows [in_pad:] multiply h; the kernel
            # slices these two halves and runs two dots (no activation concat).
            # Gate slots (each 128-lane aligned): r | z | gi_n | gh_n.
            w = np.zeros((in_pad + Hp, 4 * Hp), np.float32)
            w[:in_l, 0:H] = w_ih[0:H].T
            w[:in_l, Hp:Hp + H] = w_ih[H:2 * H].T
            w[:in_l, 2 * Hp:2 * Hp + H] = w_ih[2 * H:3 * H].T
            w[in_pad:in_pad + H, 0:H] = w_hh[0:H].T
            w[in_pad:in_pad + H, Hp:Hp + H] = w_hh[H:2 * H].T
            w[in_pad:in_pad + H, 3 * Hp:3 * Hp + H] = w_hh[2 * H:3 * H].T
            return w

        self.w0 = jnp.asarray(fuse(raw[0], raw[1], self.in_features, Ip),
                              jnp.bfloat16)
        if L > 1:
            wr = np.zeros((L - 1, 2 * Hp, 4 * Hp), np.float32)
            for l in range(1, L):
                wr[l - 1] = fuse(raw[4 * l], raw[4 * l + 1], H, Hp)
            self.wr = jnp.asarray(wr, jnp.bfloat16)
        else:
            self.wr = None   # num_layers == 1: no dummy slab DMA'd / held in VMEM

        b = np.zeros((L, 1, 4 * Hp), np.float32)
        for l in range(L):
            b_ih, b_hh = raw[4 * l + 2], raw[4 * l + 3]
            b[l, 0, 0:H] = b_ih[0:H] + b_hh[0:H]                 # r
            b[l, 0, Hp:Hp + H] = b_ih[H:2 * H] + b_hh[H:2 * H]   # z
            b[l, 0, 2 * Hp:2 * Hp + H] = b_ih[2 * H:3 * H]       # gi_n
            b[l, 0, 3 * Hp:3 * Hp + H] = b_hh[2 * H:3 * H]       # gh_n
        self.b_gates = jnp.asarray(b, jnp.float32)

        wd = np.zeros((Hp, Op), np.float32)
        wd[:H, :self.out_features] = raw[-2].T
        self.wd = jnp.asarray(wd, jnp.bfloat16)
        bd = np.zeros((1, Op), np.float32)
        bd[0, :self.out_features] = raw[-1]
        self.bd = jnp.asarray(bd, jnp.float32)

    # --- tiling / VMEM sizing --------------------------------------------------
    def _choose_tile(self, N):
        """Pick (TN, Npad): sublane-aligned batch tile, >=2 tiles when possible
        (v7x dual TensorCore), each tile at most ~512 rows (MXU-friendly)."""
        sub = 16 if jax.dtypes.canonicalize_dtype(self.dtype).itemsize < 4 else 8
        Nr = _round_up(max(N, 1), sub)
        if Nr >= 2 * sub:
            ntiles = max(2, _cdiv(Nr, 512))
            TN = _round_up(_cdiv(Nr, ntiles), sub)
        else:
            TN = Nr
        Npad = _round_up(Nr, TN)
        return TN, Npad

    def _vmem_limit_bytes(self, TN):
        """Explicit VMEM ceiling sized from the actual slab + tile footprint."""
        Ip, Hp, Op, L = self.Ip, self.Hp, self.Op, self.num_layers
        Lr = max(L - 1, 0)
        itemsize = jax.dtypes.canonicalize_dtype(self.dtype).itemsize
        weights = 2 * ((Ip + Hp) * 4 * Hp + Lr * 2 * Hp * 4 * Hp + Hp * Op)  # bf16, Buffered(1)
        biases = 4 * (L * 4 * Hp + Op)
        acts = 2 * itemsize * (TN * Ip + 2 * L * TN * Hp + TN * Op)          # double-buffered I/O blocks
        temps = 4 * TN * 4 * Hp * 4                                          # gate pre-activation temporaries
        need = weights + biases + acts + temps
        try:
            physical = int(pltpu.get_tpu_info().vmem_capacity_bytes)
        except Exception:
            physical = 64 * 1024 * 1024                                      # conservative (v7x per-TC)
        ceiling = min(int(physical * 0.85), 100 * 1024 * 1024)
        limit = int(need * 1.5) + (16 << 20)
        return max(32 << 20, min(limit, ceiling))

    # --- forward ---------------------------------------------------------------
    def _forward_padded(self, x_pad, h_pad):
        L = self.num_layers
        Ip, Hp, Op = self.Ip, self.Hp, self.Op
        Npad = x_pad.shape[0]
        TN, Npad2 = self._choose_tile(Npad)
        assert Npad2 == Npad and Npad % TN == 0, (
            "padded batch must come from pad_inputs() / _choose_tile()")
        grid = (Npad // TN,)
        Lr = L - 1

        # Grid-invariant operands: single-buffered (halves weight VMEM footprint).
        resident = functools.partial(pl.BlockSpec, pipeline_mode=pl.Buffered(1))

        in_specs = [
            pl.BlockSpec((TN, Ip), lambda i: (i, 0)),             # x (batch-blocked)
            pl.BlockSpec((L, TN, Hp), lambda i: (0, i, 0)),       # hidden (batch-blocked)
            resident((Ip + Hp, 4 * Hp), lambda i: (0, 0)),        # layer-0 fused weight
        ]
        operands = [x_pad, h_pad, self.w0]
        if Lr > 0:
            in_specs.append(resident((Lr, 2 * Hp, 4 * Hp), lambda i: (0, 0, 0)))
            operands.append(self.wr)                              # layers 1..L-1 weights
        in_specs += [
            resident((L, 1, 4 * Hp), lambda i: (0, 0, 0)),        # fused gate biases
            resident((Hp, Op), lambda i: (0, 0)),                 # decoder weight
            resident((1, Op), lambda i: (0, 0)),                  # decoder bias
        ]
        operands += [self.b_gates, self.wd, self.bd]

        flops = 2 * Npad * (Ip * 4 * Hp + Hp * 4 * Hp
                            + Lr * (2 * Hp * 4 * Hp) + Hp * Op)
        wr_bytes = 0 if self.wr is None else 2 * self.wr.size
        bytes_accessed = (4 * (Npad * Ip + 2 * L * Npad * Hp + Npad * Op)
                          + 2 * (self.w0.size + self.wd.size) + wr_bytes
                          + 4 * (self.b_gates.size + self.bd.size))
        cost = pl.CostEstimate(flops=int(flops),
                               transcendentals=int(Npad * L * 3 * Hp),
                               bytes_accessed=int(bytes_accessed))

        out_pad, h_new_pad = pl.pallas_call(
            self._kernel,
            grid=grid,
            in_specs=in_specs,
            out_specs=(
                pl.BlockSpec((TN, Op), lambda i: (i, 0)),         # decoder output
                pl.BlockSpec((L, TN, Hp), lambda i: (0, i, 0)),   # new hidden state
            ),
            out_shape=(
                jax.ShapeDtypeStruct((Npad, Op), self.dtype),
                jax.ShapeDtypeStruct((L, Npad, Hp), self.dtype),
            ),
            input_output_aliases={1: 1},  # reuse hidden-state HBM buffer
            compiler_params=pltpu.CompilerParams(
                dimension_semantics=("parallel",),
                vmem_limit_bytes=self._vmem_limit_bytes(TN)),
            cost_estimate=cost,
        )(*operands)
        return out_pad, h_new_pad

    def pad_inputs(self, input_feature, hidden_feature):
        """Pad (x, h) once into the kernel's lane/tile-aligned layout.

        For multi-step rollouts, keep the hidden state in its padded
        [L, Npad, Hp] layout between steps (feed apply_padded's second output
        straight back in): no per-step pad/slice HBM copies and the hidden-state
        buffer alias survives across steps.
        """
        N = input_feature.shape[0]
        _, Npad = self._choose_tile(N)
        x_pad = jnp.pad(input_feature.astype(self.dtype),
                        ((0, Npad - N), (0, self.Ip - self.in_features)))
        h_pad = jnp.pad(hidden_feature.astype(self.dtype),
                        ((0, 0), (0, Npad - N), (0, self.Hp - self.latent_dim)))
        return x_pad, h_pad

    @functools.partial(jax.jit, static_argnums=0)
    def apply_padded(self, x_pad, h_pad):
        """Padded-state entry point: [Npad, Ip], [L, Npad, Hp] -> padded outputs."""
        return self._forward_padded(x_pad, h_pad)

    @functools.partial(jax.jit, static_argnums=0)
    def __call__(self, input_feature, hidden_feature):
        """input_feature: [N, in_features]; hidden_feature: [L, N, latent_dim]."""
        N = input_feature.shape[0]
        x_pad, h_pad = self.pad_inputs(input_feature, hidden_feature)
        out_pad, h_new_pad = self._forward_padded(x_pad, h_pad)
        return (out_pad[:N, :self.out_features],
                h_new_pad[:, :N, :self.latent_dim])


def _reference_forward(raw, num_layers, latent_dim, x, h,
                       matmul_dtype=jnp.float32):
    """Pure-JAX PyTorch-semantics GRU + Linear reference.

    matmul_dtype=bfloat16 reproduces the kernel's MXU input precision (f32 accum);
    matmul_dtype=float32 is the exact-math semantic reference.
    """
    H = latent_dim

    def mm(a, b):
        return jnp.dot(a.astype(matmul_dtype), b.astype(matmul_dtype),
                       preferred_element_type=jnp.float32)

    cur = x.astype(jnp.float32)
    hs = []
    for l in range(num_layers):
        w_ih, w_hh, b_ih, b_hh = raw[4 * l:4 * l + 4]
        hp = h[l].astype(jnp.float32)
        gi = mm(cur, w_ih.T) + b_ih
        gh = mm(hp, w_hh.T) + b_hh
        r = jax.nn.sigmoid(gi[:, :H] + gh[:, :H])
        z = jax.nn.sigmoid(gi[:, H:2 * H] + gh[:, H:2 * H])
        n = jnp.tanh(gi[:, 2 * H:] + r * gh[:, 2 * H:])
        hn = (1.0 - z) * n + z * hp
        hs.append(hn)
        cur = hn
    w_dec, b_dec = raw[-2], raw[-1]
    out = mm(cur, w_dec.T) + b_dec
    return out, jnp.stack(hs, axis=0)


if __name__ == "__main__":
    def check_case(name, N, in_features, latent_dim, out_features, num_layers, seed):
        net = RecurrentUpdateNetPallas(in_features, latent_dim, out_features,
                                       num_layers, key=jax.random.PRNGKey(seed))
        kx, kh = jax.random.split(jax.random.PRNGKey(0))
        x = jax.random.normal(kx, (N, in_features), dtype=jnp.float32)
        h = jax.random.normal(kh, (num_layers, N, latent_dim), dtype=jnp.float32)

        out, h_new = net(x, h)
        jax.block_until_ready((out, h_new))
        assert out.shape == (N, out_features)
        assert h_new.shape == (num_layers, N, latent_dim)

        # Tight check: reference with the same bf16-MXU / f32-accumulate math.
        out_bf, h_bf = _reference_forward(net.raw, num_layers, latent_dim, x, h,
                                          matmul_dtype=jnp.bfloat16)
        assert jnp.allclose(out, out_bf, atol=2e-3), f"{name}: decoder output mismatch"
        assert jnp.allclose(h_new, h_bf, atol=2e-3), f"{name}: hidden state mismatch"

        # Loose semantic check vs exact f32 PyTorch-style GRU (bf16 MXU rounding only).
        out_f, h_f = _reference_forward(net.raw, num_layers, latent_dim, x, h,
                                        matmul_dtype=jnp.float32)
        max_diff = max(float(jnp.max(jnp.abs(out - out_f))),
                       float(jnp.max(jnp.abs(h_new - h_f))))
        assert max_diff < 1e-1, f"{name}: semantic mismatch vs f32 reference ({max_diff})"
        return net, x, h

    # Multi-layer case (single batch tile).
    net, x, h = check_case("L2", N=8, in_features=32, latent_dim=32,
                           out_features=16, num_layers=2, seed=42)

    # Single-layer case with >=2 batch tiles: exercises the specialized no-wr
    # kernel signature and the dual-TensorCore-friendly grid split.
    check_case("L1_grid2", N=16, in_features=24, latent_dim=40,
               out_features=8, num_layers=1, seed=7)

    # Padded-state rollout API: pad once, chain the hidden state without per-step
    # pad/slice HBM copies.
    x_pad, h_pad = net.pad_inputs(x, h)
    for _ in range(3):
        out_pad, h_pad = net.apply_padded(x_pad, h_pad)
    jax.block_until_ready((out_pad, h_pad))

    print("KERNEL_OK")
</pallas_src>

<mosaic_0001>
module attributes {stable_mosaic.version = 11 : i64} {
  func.func @body(%arg0: i32, %arg1: memref<8x128xf32, #tpu.memory_space<vmem>>, %arg2: memref<2x8x128xf32, #tpu.memory_space<vmem>>, %arg3: memref<256x512xbf16, #tpu.memory_space<vmem>>, %arg4: memref<1x256x512xbf16, #tpu.memory_space<vmem>>, %arg5: memref<2x1x512xf32, #tpu.memory_space<vmem>>, %arg6: memref<128x128xbf16, #tpu.memory_space<vmem>>, %arg7: memref<1x128xf32, #tpu.memory_space<vmem>>, %arg8: memref<8x128xf32, #tpu.memory_space<vmem>>, %arg9: memref<2x8x128xf32, #tpu.memory_space<vmem>>) attributes {dimension_semantics = [#tpu.dimension_semantics<parallel>], iteration_bounds = array<i64: 1>, scalar_prefetch = 0 : i64, scratch_operands = 0 : i64, tpu.core_type = #tpu.core_type<tc>, window_params = [{transform_indices = @transform_0, window_bounds = array<i64: 8, 128>}, {transform_indices = @transform_1, window_bounds = array<i64: 2, 8, 128>}, {pipeline_mode = #tpu.pipeline_mode<synchronous>, transform_indices = @transform_2, window_bounds = array<i64: 256, 512>}, {pipeline_mode = #tpu.pipeline_mode<synchronous>, transform_indices = @transform_3, window_bounds = array<i64: 1, 256, 512>}, {pipeline_mode = #tpu.pipeline_mode<synchronous>, transform_indices = @transform_4, window_bounds = array<i64: 2, 1, 512>}, {pipeline_mode = #tpu.pipeline_mode<synchronous>, transform_indices = @transform_5, window_bounds = array<i64: 128, 128>}, {pipeline_mode = #tpu.pipeline_mode<synchronous>, transform_indices = @transform_6, window_bounds = array<i64: 1, 128>}, {transform_indices = @transform_7, window_bounds = array<i64: 8, 128>}, {transform_indices = @transform_8, window_bounds = array<i64: 2, 8, 128>}]} {
    %c0 = arith.constant 0 : index
    %c0_0 = arith.constant 0 : index
    %0 = vector.load %arg1[%c0, %c0_0] : memref<8x128xf32, #tpu.memory_space<vmem>>, vector<8x128xf32>
    %1 = arith.truncf %0 : vector<8x128xf32> to vector<8x128xbf16>
    %c0_1 = arith.constant 0 : index
    %c0_2 = arith.constant 0 : index
    %c0_3 = arith.constant 0 : index
    %2 = vector.load %arg2[%c0_1, %c0_2, %c0_3] : memref<2x8x128xf32, #tpu.memory_space<vmem>>, vector<1x8x128xf32>
    %3 = vector.shape_cast %2 : vector<1x8x128xf32> to vector<8x128xf32>
    %4 = arith.truncf %3 : vector<8x128xf32> to vector<8x128xbf16>
    %c0_4 = arith.constant 0 : index
    %c0_5 = arith.constant 0 : index
    %5 = vector.load %arg3[%c0_4, %c0_5] : memref<256x512xbf16, #tpu.memory_space<vmem>>, vector<128x512xbf16>
    %c128 = arith.constant 128 : index
    %c0_6 = arith.constant 0 : index
    %6 = vector.load %arg3[%c128, %c0_6] : memref<256x512xbf16, #tpu.memory_space<vmem>>, vector<128x512xbf16>
    %cst = arith.constant dense<0.000000e+00> : vector<8x512xf32>
    %7 = tpu.matmul %1, %5, %cst {dimension_numbers = #tpu.dot_dimension_numbers<[1], [0], [0], [1], [0, 0, 1, 1], [], []>} : vector<8x128xbf16>, vector<128x512xbf16>, vector<8x512xf32> -> vector<8x512xf32>
    %cst_7 = arith.constant dense<0.000000e+00> : vector<8x512xf32>
    %8 = tpu.matmul %4, %6, %cst_7 {dimension_numbers = #tpu.dot_dimension_numbers<[1], [0], [0], [1], [0, 0, 1, 1], [], []>} : vector<8x128xbf16>, vector<128x512xbf16>, vector<8x512xf32> -> vector<8x512xf32>
    %9 = arith.addf %7, %8 : vector<8x512xf32>
    %c0_8 = arith.constant 0 : index
    %c0_9 = arith.constant 0 : index
    %c0_10 = arith.constant 0 : index
    %10 = vector.load %arg5[%c0_8, %c0_9, %c0_10] : memref<2x1x512xf32, #tpu.memory_space<vmem>>, vector<1x1x512xf32>
    %11 = vector.shape_cast %10 : vector<1x1x512xf32> to vector<1x512xf32>
    %12 = vector.broadcast %11 : vector<1x512xf32> to vector<8x512xf32>
    %13 = arith.addf %9, %12 : vector<8x512xf32>
    %14 = vector.extract_strided_slice %13 {offsets = [0, 0], sizes = [8, 256], strides = [1, 1]} : vector<8x512xf32> to vector<8x256xf32>
    %15 = arith.negf %14 : vector<8x256xf32>
    %16 = math.exp %15 : vector<8x256xf32>
    %cst_11 = arith.constant 1.000000e+00 : f32
    %17 = vector.broadcast %cst_11 : f32 to vector<8x256xf32>
    %18 = arith.addf %17, %16 : vector<8x256xf32>
    %19 = arith.divf %17, %18 : vector<8x256xf32>
    %20 = vector.extract_strided_slice %19 {offsets = [0, 0], sizes = [8, 128], strides = [1, 1]} : vector<8x256xf32> to vector<8x128xf32>
    %21 = vector.extract_strided_slice %19 {offsets = [0, 128], sizes = [8, 128], strides = [1, 1]} : vector<8x256xf32> to vector<8x128xf32>
    %22 = vector.extract_strided_slice %13 {offsets = [0, 256], sizes = [8, 128], strides = [1, 1]} : vector<8x512xf32> to vector<8x128xf32>
    %23 = vector.extract_strided_slice %13 {offsets = [0, 384], sizes = [8, 128], strides = [1, 1]} : vector<8x512xf32> to vector<8x128xf32>
    %24 = arith.mulf %20, %23 : vector<8x128xf32>
    %25 = arith.addf %22, %24 : vector<8x128xf32>
    %26 = math.tanh %25 : vector<8x128xf32>
    %cst_12 = arith.constant 1.000000e+00 : f32
    %27 = vector.broadcast %cst_12 : f32 to vector<8x128xf32>
    %28 = arith.subf %27, %21 : vector<8x128xf32>
    %29 = arith.mulf %28, %26 : vector<8x128xf32>
    %30 = arith.mulf %21, %3 : vector<8x128xf32>
    %31 = arith.addf %29, %30 : vector<8x128xf32>
    %c0_13 = arith.constant 0 : index
    %c0_14 = arith.constant 0 : index
    %c0_15 = arith.constant 0 : index
    %32 = vector.load %arg9[%c0_13, %c0_14, %c0_15] : memref<2x8x128xf32, #tpu.memory_space<vmem>>, vector<1x8x128xf32>
    %33 = vector.shape_cast %32 : vector<1x8x128xf32> to vector<8x128xf32>
    %34 = vector.shape_cast %31 : vector<8x128xf32> to vector<1x8x128xf32>
    tpu.vector_store %arg9[%c0_13, %c0_14, %c0_15], %34 {strides = array<i32>} : memref<2x8x128xf32, #tpu.memory_space<vmem>>, vector<1x8x128xf32>,
    %35 = arith.truncf %31 : vector<8x128xf32> to vector<8x128xbf16>
    %c1 = arith.constant 1 : index
    %c0_16 = arith.constant 0 : index
    %c0_17 = arith.constant 0 : index
    %36 = vector.load %arg2[%c1, %c0_16, %c0_17] : memref<2x8x128xf32, #tpu.memory_space<vmem>>, vector<1x8x128xf32>
    %37 = vector.shape_cast %36 : vector<1x8x128xf32> to vector<8x128xf32>
    %38 = arith.truncf %37 : vector<8x128xf32> to vector<8x128xbf16>
    %c0_18 = arith.constant 0 : index
    %c0_19 = arith.constant 0 : index
    %c0_20 = arith.constant 0 : index
    %39 = vector.load %arg4[%c0_18, %c0_19, %c0_20] : memref<1x256x512xbf16, #tpu.memory_space<vmem>>, vector<1x128x512xbf16>
    %40 = vector.shape_cast %39 : vector<1x128x512xbf16> to vector<128x512xbf16>
    %c0_21 = arith.constant 0 : index
    %c128_22 = arith.constant 128 : index
    %c0_23 = arith.constant 0 : index
    %41 = vector.load %arg4[%c0_21, %c128_22, %c0_23] : memref<1x256x512xbf16, #tpu.memory_space<vmem>>, vector<1x128x512xbf16>
    %42 = vector.shape_cast %41 : vector<1x128x512xbf16> to vector<128x512xbf16>
    %cst_24 = arith.constant dense<0.000000e+00> : vector<8x512xf32>
    %43 = tpu.matmul %35, %40, %cst_24 {dimension_numbers = #tpu.dot_dimension_numbers<[1], [0], [0], [1], [0, 0, 1, 1], [], []>} : vector<8x128xbf16>, vector<128x512xbf16>, vector<8x512xf32> -> vector<8x512xf32>
    %cst_25 = arith.constant dense<0.000000e+00> : vector<8x512xf32>
    %44 = tpu.matmul %38, %42, %cst_25 {dimension_numbers = #tpu.dot_dimension_numbers<[1], [0], [0], [1], [0, 0, 1, 1], [], []>} : vector<8x128xbf16>, vector<128x512xbf16>, vector<8x512xf32> -> vector<8x512xf32>
    %45 = arith.addf %43, %44 : vector<8x512xf32>
    %c1_26 = arith.constant 1 : index
    %c0_27 = arith.constant 0 : index
    %c0_28 = arith.constant 0 : index
    %46 = vector.load %arg5[%c1_26, %c0_27, %c0_28] : memref<2x1x512xf32, #tpu.memory_space<vmem>>, vector<1x1x512xf32>
    %47 = vector.shape_cast %46 : vector<1x1x512xf32> to vector<1x512xf32>
    %48 = vector.broadcast %47 : vector<1x512xf32> to vector<8x512xf32>
    %49 = arith.addf %45, %48 : vector<8x512xf32>
    %50 = vector.extract_strided_slice %49 {offsets = [0, 0], sizes = [8, 256], strides = [1, 1]} : vector<8x512xf32> to vector<8x256xf32>
    %51 = arith.negf %50 : vector<8x256xf32>
    %52 = math.exp %51 : vector<8x256xf32>
    %cst_29 = arith.constant 1.000000e+00 : f32
    %53 = vector.broadcast %cst_29 : f32 to vector<8x256xf32>
    %54 = arith.addf %53, %52 : vector<8x256xf32>
    %55 = arith.divf %53, %54 : vector<8x256xf32>
    %56 = vector.extract_strided_slice %55 {offsets = [0, 0], sizes = [8, 128], strides = [1, 1]} : vector<8x256xf32> to vector<8x128xf32>
    %57 = vector.extract_strided_slice %55 {offsets = [0, 128], sizes = [8, 128], strides = [1, 1]} : vector<8x256xf32> to vector<8x128xf32>
    %58 = vector.extract_strided_slice %49 {offsets = [0, 256], sizes = [8, 128], strides = [1, 1]} : vector<8x512xf32> to vector<8x128xf32>
    %59 = vector.extract_strided_slice %49 {offsets = [0, 384], sizes = [8, 128], strides = [1, 1]} : vector<8x512xf32> to vector<8x128xf32>
    %60 = arith.mulf %56, %59 : vector<8x128xf32>
    %61 = arith.addf %58, %60 : vector<8x128xf32>
    %62 = math.tanh %61 : vector<8x128xf32>
    %cst_30 = arith.constant 1.000000e+00 : f32
    %63 = vector.broadcast %cst_30 : f32 to vector<8x128xf32>
    %64 = arith.subf %63, %57 : vector<8x128xf32>
    %65 = arith.mulf %64, %62 : vector<8x128xf32>
    %66 = arith.mulf %57, %37 : vector<8x128xf32>
    %67 = arith.addf %65, %66 : vector<8x128xf32>
    %c1_31 = arith.constant 1 : index
    %c0_32 = arith.constant 0 : index
    %c0_33 = arith.constant 0 : index
    %68 = vector.load %arg9[%c1_31, %c0_32, %c0_33] : memref<2x8x128xf32, #tpu.memory_space<vmem>>, vector<1x8x128xf32>
    %69 = vector.shape_cast %68 : vector<1x8x128xf32> to vector<8x128xf32>
    %70 = vector.shape_cast %67 : vector<8x128xf32> to vector<1x8x128xf32>
    tpu.vector_store %arg9[%c1_31, %c0_32, %c0_33], %70 {strides = array<i32>} : memref<2x8x128xf32, #tpu.memory_space<vmem>>, vector<1x8x128xf32>,
    %71 = arith.truncf %67 : vector<8x128xf32> to vector<8x128xbf16>
    %c0_34 = arith.constant 0 : index
    %c0_35 = arith.constant 0 : index
    %72 = vector.load %arg6[%c0_34, %c0_35] : memref<128x128xbf16, #tpu.memory_space<vmem>>, vector<128x128xbf16>
    %cst_36 = arith.constant dense<0.000000e+00> : vector<8x128xf32>
    %73 = tpu.matmul %71, %72, %cst_36 {dimension_numbers = #tpu.dot_dimension_numbers<[1], [0], [0], [1], [0, 0, 1, 1], [], []>} : vector<8x128xbf16>, vector<128x128xbf16>, vector<8x128xf32> -> vector<8x128xf32>
    %c0_37 = arith.constant 0 : index
    %c0_38 = arith.constant 0 : index
    %74 = vector.load %arg7[%c0_37, %c0_38] : memref<1x128xf32, #tpu.memory_space<vmem>>, vector<1x128xf32>
    %75 = vector.broadcast %74 : vector<1x128xf32> to vector<8x128xf32>
    %76 = arith.addf %73, %75 : vector<8x128xf32>
    %c0_39 = arith.constant 0 : index
    %c0_40 = arith.constant 0 : index
    %77 = vector.load %arg8[%c0_39, %c0_40] : memref<8x128xf32, #tpu.memory_space<vmem>>, vector<8x128xf32>
    tpu.vector_store %arg8[%c0_39, %c0_40], %76 {strides = array<i32>} : memref<8x128xf32, #tpu.memory_space<vmem>>, vector<8x128xf32>,
    return
  }
  func.func @transform_0(%arg0: i32) -> (i32, i32) {
    %c0_i32 = arith.constant 0 : i32
    %c0_i32_0 = arith.constant 0 : i32
    return %arg0, %c0_i32 : i32, i32
  }
  func.func @transform_1(%arg0: i32) -> (i32, i32, i32) {
    %c0_i32 = arith.constant 0 : i32
    %c0_i32_0 = arith.constant 0 : i32
    %c0_i32_1 = arith.constant 0 : i32
    return %c0_i32, %arg0, %c0_i32_0 : i32, i32, i32
  }
  func.func @transform_2(%arg0: i32) -> (i32, i32) {
    %c0_i32 = arith.constant 0 : i32
    %c0_i32_0 = arith.constant 0 : i32
    %c0_i32_1 = arith.constant 0 : i32
    return %c0_i32, %c0_i32_0 : i32, i32
  }
  func.func @transform_3(%arg0: i32) -> (i32, i32, i32) {
    %c0_i32 = arith.constant 0 : i32
    %c0_i32_0 = arith.constant 0 : i32
    %c0_i32_1 = arith.constant 0 : i32
    %c0_i32_2 = arith.constant 0 : i32
    return %c0_i32, %c0_i32_0, %c0_i32_1 : i32, i32, i32
  }
  func.func @transform_4(%arg0: i32) -> (i32, i32, i32) {
    %c0_i32 = arith.constant 0 : i32
    %c0_i32_0 = arith.constant 0 : i32
    %c0_i32_1 = arith.constant 0 : i32
    %c0_i32_2 = arith.constant 0 : i32
    return %c0_i32, %c0_i32_0, %c0_i32_1 : i32, i32, i32
  }
  func.func @transform_5(%arg0: i32) -> (i32, i32) {
    %c0_i32 = arith.constant 0 : i32
    %c0_i32_0 = arith.constant 0 : i32
    %c0_i32_1 = arith.constant 0 : i32
    return %c0_i32, %c0_i32_0 : i32, i32
  }
  func.func @transform_6(%arg0: i32) -> (i32, i32) {
    %c0_i32 = arith.constant 0 : i32
    %c0_i32_0 = arith.constant 0 : i32
    %c0_i32_1 = arith.constant 0 : i32
    return %c0_i32, %c0_i32_0 : i32, i32
  }
  func.func @transform_7(%arg0: i32) -> (i32, i32) {
    %c0_i32 = arith.constant 0 : i32
    %c0_i32_0 = arith.constant 0 : i32
    return %arg0, %c0_i32 : i32, i32
  }
  func.func @transform_8(%arg0: i32) -> (i32, i32, i32) {
    %c0_i32 = arith.constant 0 : i32
    %c0_i32_0 = arith.constant 0 : i32
    %c0_i32_1 = arith.constant 0 : i32
    return %c0_i32, %arg0, %c0_i32_0 : i32, i32, i32
  }
}

</mosaic_0001>

<llo_original>
// kernel: a_call__.1
$region0: #{a_call__.1}
  #allocation0 [shape = 'u32[]', space=smem, size = 0x4, offset = 0x4, fixed_abs, tag = 'smem constant byte address 0x4 - core index']
  #allocation1 [shape = 'u32[72,128]{1,0:T(1,128)}', space=vmem, size = 0x9000, scoped, tag = 'internal scratch']
  %s0 = inlined_call_operand.vmem [shape: f32[8,128], index: 0, kind: input, shape index: {}]
  %s1 = inlined_call_operand.vmem [shape: f32[2,8,128], index: 1, kind: input, shape index: {}, may-alias: {1,8}]
  %s2 = inlined_call_operand.hbm [shape: bf16[256,512], index: 2, kind: input, shape index: {}]
  %s3 = inlined_call_operand.hbm [shape: bf16[1,256,512], index: 3, kind: input, shape index: {}]
  %s4 = inlined_call_operand.vmem [shape: f32[2,1,512], index: 4, kind: input, shape index: {}]
  %s5 = inlined_call_operand.hbm [shape: bf16[128,128], index: 5, kind: input, shape index: {}]
  %s6 = inlined_call_operand.vmem [shape: f32[1,128], index: 6, kind: input, shape index: {}]
  %s7 = inlined_call_operand.hbm [shape: f32[8,128], index: 7, kind: output, shape index: {0}]
  %s8 = inlined_call_operand.vmem [shape: f32[2,8,128], index: 8, kind: output, shape index: {1}, may-alias: {1,8}]
  %9 = xla_tuple %s7, %s8
  %s10 = sld [smem:[#allocation0]]
  $region58: #{a_call__.1} parent=0
    _
  %s12 = ssub.s32 1, %s10
  %s13 = scalar_select 0, %s12, %s10
  $region1: #{a_call__.1} parent=0
    #allocation2 [shape = 'u8[262144]{0}', space=vmem, size = 0x40000, scoped, tag = 'input window, operand 2, single buffered']
    #allocation3 [shape = 's32[1]{0}', space=sflag, size = 0x4, scoped, tag = 'scoped memory for a_call__.1']
    #allocation4 [shape = 's32[1]{0}', space=sflag, size = 0x4, scoped, tag = 'scoped memory for a_call__.1']
    #allocation5 [shape = 'u8[262144]{0}', space=vmem, size = 0x40000, scoped, tag = 'input window, operand 3, single buffered']
    #allocation6 [shape = 's32[1]{0}', space=sflag, size = 0x4, scoped, tag = 'scoped memory for a_call__.1']
    #allocation7 [shape = 'u8[32768]{0}', space=vmem, size = 0x8000, scoped, tag = 'input window, operand 5, single buffered']
    #allocation8 [shape = 'u8[4096]{0}', space=vmem, size = 0x1000, scoped, tag = 'output window, operand 0, single buffered']
    %14 = vsyncpa [#allocation3], 0
    %15 = vsyncpa [#allocation6], 0
    %16 = vsyncpa [#allocation4], 0
    // Predicated region
    $region2: #{a_call__.1} parent=1 // pred_check
      _
    $region3: #{a_call__.1} parent=1 // pred_check_branch
      %18 = sbr.rel (0) target = $region5
    $region4: #{a_call__.1} parent=1 // pred_region
      _
    $region5: #{a_call__.1} parent=1 // pred_fallthru
      _
    // Predicated region
    $region6: #{a_call__.1} parent=1 // pred_check
      _
    $region7: #{a_call__.1} parent=1 // pred_check_branch
      %20 = sbr.rel (0) target = $region9
    $region8: #{a_call__.1} parent=1 // pred_region
      _
    $region9: #{a_call__.1} parent=1 // pred_fallthru
      _
    // Predicated region
    $region10: #{a_call__.1} parent=1 // pred_check
      _
    $region11: #{a_call__.1} parent=1 // pred_check_branch
      %22 = sbr.rel (0) target = $region13
    $region12: #{a_call__.1} parent=1 // pred_region
      %24 = vsyncadd [#allocation3], 0
      %s25 = sshll.u32 %s2, 4
      %s26 = int_to_ptr.hbm [resolvable:$true] %s25
      %s27 = sshll.u32 [#allocation2], 4
      %s28 = int_to_ptr.vmem [resolvable:$true] %s27
      %33 = dma.hbm_to_vmem [thread:$0]  %s26, 8192, %s28, [#allocation3], 256, 256, 16
    $region13: #{a_call__.1} parent=1 // pred_fallthru
      _
    // Predicated region
    $region14: #{a_call__.1} parent=1 // pred_check
      _
    $region15: #{a_call__.1} parent=1 // pred_check_branch
      %35 = sbr.rel (0) target = $region17
    $region16: #{a_call__.1} parent=1 // pred_region
      %37 = vsyncadd [#allocation6], 0
      %s38 = sshll.u32 %s3, 4
      %s39 = int_to_ptr.hbm [resolvable:$true] %s38
      %s40 = sshll.u32 [#allocation5], 4
      %s41 = int_to_ptr.vmem [resolvable:$true] %s40
      %46 = dma.hbm_to_vmem [thread:$0]  %s39, 8192, %s41, [#allocation6], 256, 256, 16
    $region17: #{a_call__.1} parent=1 // pred_fallthru
      _
    // Predicated region
    $region18: #{a_call__.1} parent=1 // pred_check
      _
    $region19: #{a_call__.1} parent=1 // pred_check_branch
      %48 = sbr.rel (0) target = $region21
    $region20: #{a_call__.1} parent=1 // pred_region
      _
    $region21: #{a_call__.1} parent=1 // pred_fallthru
      _
    // Predicated region
    $region22: #{a_call__.1} parent=1 // pred_check
      _
    $region23: #{a_call__.1} parent=1 // pred_check_branch
      %50 = sbr.rel (0) target = $region25
    $region24: #{a_call__.1} parent=1 // pred_region
      %52 = vsyncadd [#allocation6], 0
      %s53 = sshll.u32 %s5, 4
      %s54 = int_to_ptr.hbm [resolvable:$true] %s53
      %s55 = sshll.u32 [#allocation7], 4
      %s56 = int_to_ptr.vmem [resolvable:$true] %s55
      %61 = dma.hbm_to_vmem [thread:$0]  %s54, 1024, %s56, [#allocation6], 64, 64, 4
    $region25: #{a_call__.1} parent=1 // pred_fallthru
      _
    // Predicated region
    $region26: #{a_call__.1} parent=1 // pred_check
      _
    $region27: #{a_call__.1} parent=1 // pred_check_branch
      %63 = sbr.rel (0) target = $region29
    $region28: #{a_call__.1} parent=1 // pred_region
      _
    $region29: #{a_call__.1} parent=1 // pred_fallthru
      _
    // Predicated region
    $region30: #{a_call__.1} parent=1 // pred_check
      _
    $region31: #{a_call__.1} parent=1 // pred_check_branch
      %65 = sbr.rel (0) target = $region33
    $region32: #{a_call__.1} parent=1 // pred_region
      %67 = dma.done [#allocation3], 8192
    $region33: #{a_call__.1} parent=1 // pred_fallthru
      _
    // Predicated region
    $region34: #{a_call__.1} parent=1 // pred_check
      _
    $region35: #{a_call__.1} parent=1 // pred_check_branch
      %69 = sbr.rel (0) target = $region37
    $region36: #{a_call__.1} parent=1 // pred_region
      %71 = dma.done [#allocation6], 8192
    $region37: #{a_call__.1} parent=1 // pred_fallthru
      _
    // Predicated region
    $region38: #{a_call__.1} parent=1 // pred_check
      _
    $region39: #{a_call__.1} parent=1 // pred_check_branch
      %73 = sbr.rel (0) target = $region41
    $region40: #{a_call__.1} parent=1 // pred_region
      %75 = dma.done [#allocation6], 1024
    $region41: #{a_call__.1} parent=1 // pred_fallthru
      _
    %v76 = vld [vmem:[%s0] sm:$0xff]
    %v77 = vpack.c.bf16 %v76, %v76
    %v78 = vld [vmem:[%s1] sm:$0xff]
    %v79 = vpack.c.bf16 %v78, %v78
    %v80 = vld [vmem:[#allocation2] sm:$0xff]
    %v81 = vld [vmem:[#allocation2 + $0x8] sm:$0xff]
    %v82 = vld [vmem:[#allocation2 + $0x10] sm:$0xff]
    %v83 = vld [vmem:[#allocation2 + $0x18] sm:$0xff]
    %v84 = vld [vmem:[#allocation2 + $0x20] sm:$0xff]
    %v85 = vld [vmem:[#allocation2 + $0x28] sm:$0xff]
    %v86 = vld [vmem:[#allocation2 + $0x30] sm:$0xff]
    %v87 = vld [vmem:[#allocation2 + $0x38] sm:$0xff]
    %v88 = vld [vmem:[#allocation2 + $0x40] sm:$0xff]
    %v89 = vld [vmem:[#allocation2 + $0x48] sm:$0xff]
    %v90 = vld [vmem:[#allocation2 + $0x50] sm:$0xff]
    %v91 = vld [vmem:[#allocation2 + $0x58] sm:$0xff]
    %v92 = vld [vmem:[#allocation2 + $0x60] sm:$0xff]
    %v93 = vld [vmem:[#allocation2 + $0x68] sm:$0xff]
    %v94 = vld [vmem:[#allocation2 + $0x70] sm:$0xff]
    %v95 = vld [vmem:[#allocation2 + $0x78] sm:$0xff]
    %v96 = vld [vmem:[#allocation2 + $0x80] sm:$0xff]
    %v97 = vld [vmem:[#allocation2 + $0x88] sm:$0xff]
    %v98 = vld [vmem:[#allocation2 + $0x90] sm:$0xff]
    %v99 = vld [vmem:[#allocation2 + $0x98] sm:$0xff]
    %v100 = vld [vmem:[#allocation2 + $0xa0] sm:$0xff]
    %v101 = vld [vmem:[#allocation2 + $0xa8] sm:$0xff]
    %v102 = vld [vmem:[#allocation2 + $0xb0] sm:$0xff]
    %v103 = vld [vmem:[#allocation2 + $0xb8] sm:$0xff]
    %v104 = vld [vmem:[#allocation2 + $0xc0] sm:$0xff]
    %v105 = vld [vmem:[#allocation2 + $0xc8] sm:$0xff]
    %v106 = vld [vmem:[#allocation2 + $0xd0] sm:$0xff]
    %v107 = vld [vmem:[#allocation2 + $0xd8] sm:$0xff]
    %v108 = vld [vmem:[#allocation2 + $0xe0] sm:$0xff]
    %v109 = vld [vmem:[#allocation2 + $0xe8] sm:$0xff]
    %v110 = vld [vmem:[#allocation2 + $0xf0] sm:$0xff]
    %v111 = vld [vmem:[#allocation2 + $0xf8] sm:$0xff]
    %v112 = vld [vmem:[#allocation2 + $0x100] sm:$0xff]
    %v113 = vld [vmem:[#allocation2 + $0x108] sm:$0xff]
    %v114 = vld [vmem:[#allocation2 + $0x110] sm:$0xff]
    %v115 = vld [vmem:[#allocation2 + $0x118] sm:$0xff]
    %v116 = vld [vmem:[#allocation2 + $0x120] sm:$0xff]
    %v117 = vld [vmem:[#allocation2 + $0x128] sm:$0xff]
    %v118 = vld [vmem:[#allocation2 + $0x130] sm:$0xff]
    %v119 = vld [vmem:[#allocation2 + $0x138] sm:$0xff]
    %v120 = vld [vmem:[#allocation2 + $0x140] sm:$0xff]
    %v121 = vld [vmem:[#allocation2 + $0x148] sm:$0xff]
    %v122 = vld [vmem:[#allocation2 + $0x150] sm:$0xff]
    %v123 = vld [vmem:[#allocation2 + $0x158] sm:$0xff]
    %v124 = vld [vmem:[#allocation2 + $0x160] sm:$0xff]
    %v125 = vld [vmem:[#allocation2 + $0x168] sm:$0xff]
    %v126 = vld [vmem:[#allocation2 + $0x170] sm:$0xff]
    %v127 = vld [vmem:[#allocation2 + $0x178] sm:$0xff]
    %v128 = vld [vmem:[#allocation2 + $0x180] sm:$0xff]
    %v129 = vld [vmem:[#allocation2 + $0x188] sm:$0xff]
    %v130 = vld [vmem:[#allocation2 + $0x190] sm:$0xff]
    %v131 = vld [vmem:[#allocation2 + $0x198] sm:$0xff]
    %v132 = vld [vmem:[#allocation2 + $0x1a0] sm:$0xff]
    %v133 = vld [vmem:[#allocation2 + $0x1a8] sm:$0xff]
    %v134 = vld [vmem:[#allocation2 + $0x1b0] sm:$0xff]
    %v135 = vld [vmem:[#allocation2 + $0x1b8] sm:$0xff]
    %v136 = vld [vmem:[#allocation2 + $0x1c0] sm:$0xff]
    %v137 = vld [vmem:[#allocation2 + $0x1c8] sm:$0xff]
    %v138 = vld [vmem:[#allocation2 + $0x1d0] sm:$0xff]
    %v139 = vld [vmem:[#allocation2 + $0x1d8] sm:$0xff]
    %v140 = vld [vmem:[#allocation2 + $0x1e0] sm:$0xff]
    %v141 = vld [vmem:[#allocation2 + $0x1e8] sm:$0xff]
    %v142 = vld [vmem:[#allocation2 + $0x1f0] sm:$0xff]
    %v143 = vld [vmem:[#allocation2 + $0x1f8] sm:$0xff]
    %v176 = vunpack.c.l.b16 %v112
    %v177 = vunpack.c.h.b16 %v112
    %v178 = vunpack.c.l.b16 %v113
    %v179 = vunpack.c.h.b16 %v113
    %v180 = vunpack.c.l.b16 %v114
    %v181 = vunpack.c.h.b16 %v114
    %v182 = vunpack.c.l.b16 %v115
    %v183 = vunpack.c.h.b16 %v115
    %v184 = vunpack.c.l.b16 %v116
    %v185 = vunpack.c.h.b16 %v116
    %v186 = vunpack.c.l.b16 %v117
    %v187 = vunpack.c.h.b16 %v117
    %v188 = vunpack.c.l.b16 %v118
    %v189 = vunpack.c.h.b16 %v118
    %v190 = vunpack.c.l.b16 %v119
    %v191 = vunpack.c.h.b16 %v119
    %v192 = vunpack.c.l.b16 %v120
    %v193 = vunpack.c.h.b16 %v120
    %v194 = vunpack.c.l.b16 %v121
    %v195 = vunpack.c.h.b16 %v121
    %v196 = vunpack.c.l.b16 %v122
    %v197 = vunpack.c.h.b16 %v122
    %v198 = vunpack.c.l.b16 %v123
    %v199 = vunpack.c.h.b16 %v123
    %v200 = vunpack.c.l.b16 %v124
    %v201 = vunpack.c.h.b16 %v124
    %v202 = vunpack.c.l.b16 %v125
    %v203 = vunpack.c.h.b16 %v125
    %v204 = vunpack.c.l.b16 %v126
    %v205 = vunpack.c.h.b16 %v126
    %v206 = vunpack.c.l.b16 %v127
    %v207 = vunpack.c.h.b16 %v127
    %v208 = vunpack.c.l.b16 %v128
    %v209 = vunpack.c.h.b16 %v128
    %v210 = vunpack.c.l.b16 %v129
    %v211 = vunpack.c.h.b16 %v129
    %v212 = vunpack.c.l.b16 %v130
    %v213 = vunpack.c.h.b16 %v130
    %v214 = vunpack.c.l.b16 %v131
    %v215 = vunpack.c.h.b16 %v131
    %v216 = vunpack.c.l.b16 %v132
    %v217 = vunpack.c.h.b16 %v132
    %v218 = vunpack.c.l.b16 %v133
    %v219 = vunpack.c.h.b16 %v133
    %v220 = vunpack.c.l.b16 %v134
    %v221 = vunpack.c.h.b16 %v134
    %v222 = vunpack.c.l.b16 %v135
    %v223 = vunpack.c.h.b16 %v135
    %v224 = vunpack.c.l.b16 %v136
    %v225 = vunpack.c.h.b16 %v136
    %v226 = vunpack.c.l.b16 %v137
    %v227 = vunpack.c.h.b16 %v137
    %v228 = vunpack.c.l.b16 %v138
    %v229 = vunpack.c.h.b16 %v138
    %v230 = vunpack.c.l.b16 %v139
    %v231 = vunpack.c.h.b16 %v139
    %v232 = vunpack.c.l.b16 %v140
    %v233 = vunpack.c.h.b16 %v140
    %v234 = vunpack.c.l.b16 %v141
    %v235 = vunpack.c.h.b16 %v141
    %v236 = vunpack.c.l.b16 %v142
    %v237 = vunpack.c.h.b16 %v142
    %v238 = vunpack.c.l.b16 %v143
    %v239 = vunpack.c.h.b16 %v143
    %v240 = vpack.c.b16 %v180, %v176
    %v241 = vpack.c.b16 %v181, %v177
    %v242 = vpack.c.b16 %v182, %v178
    %v243 = vpack.c.b16 %v183, %v179
    %v244 = vpack.c.b16 %v188, %v184
    %v245 = vpack.c.b16 %v189, %v185
    %v246 = vpack.c.b16 %v190, %v186
    %v247 = vpack.c.b16 %v191, %v187
    %v248 = vpack.c.b16 %v196, %v192
    %v249 = vpack.c.b16 %v197, %v193
    %v250 = vpack.c.b16 %v198, %v194
    %v251 = vpack.c.b16 %v199, %v195
    %v252 = vpack.c.b16 %v204, %v200
    %v253 = vpack.c.b16 %v205, %v201
    %v254 = vpack.c.b16 %v206, %v202
    %v255 = vpack.c.b16 %v207, %v203
    %v256 = vpack.c.b16 %v212, %v208
    %v257 = vpack.c.b16 %v213, %v209
    %v258 = vpack.c.b16 %v214, %v210
    %v259 = vpack.c.b16 %v215, %v211
    %v260 = vpack.c.b16 %v220, %v216
    %v261 = vpack.c.b16 %v221, %v217
    %v262 = vpack.c.b16 %v222, %v218
    %v263 = vpack.c.b16 %v223, %v219
    %v264 = vpack.c.b16 %v228, %v224
    %v265 = vpack.c.b16 %v229, %v225
    %v266 = vpack.c.b16 %v230, %v226
    %v267 = vpack.c.b16 %v231, %v227
    %v268 = vpack.c.b16 %v236, %v232
    %v269 = vpack.c.b16 %v237, %v233
    %v270 = vpack.c.b16 %v238, %v234
    %v271 = vpack.c.b16 %v239, %v235
    %304 = vmatpush.bf16.msra.mxu0 %v268
    %305 = vmatpush.bf16.msra.mxu0 %v264
    %306 = vmatpush.bf16.msra.mxu0 %v260
    %307 = vmatpush.bf16.msra.mxu0 %v256
    %308 = vmatpush.bf16.msra.mxu0 %v252
    %309 = vmatpush.bf16.msra.mxu0 %v248
    %310 = vmatpush.bf16.msra.mxu0 %v244
    %311 = vmatpush.bf16.msra.mxu0 %v240
    %312 = vmatmul.bf16.gmra.mxu0 %v79
    %v313 = vpop.f32.mrf.mxu0
    %v314 = vadd.f32 0.0, %v313
    %v315 = vpop.f32.mrf.mxu0
    %316 = vdwg.mxu0
    %317 = vmatpush.bf16.msra.mxu0 %v269
    %318 = vmatpush.bf16.msra.mxu0 %v265
    %319 = vmatpush.bf16.msra.mxu0 %v261
    %320 = vmatpush.bf16.msra.mxu0 %v257
    %321 = vmatpush.bf16.msra.mxu0 %v253
    %322 = vmatpush.bf16.msra.mxu0 %v249
    %323 = vmatpush.bf16.msra.mxu0 %v245
    %324 = vmatpush.bf16.msra.mxu0 %v241
    %325 = vmatmul.bf16.gmra.mxu0 %v79
    %v326 = vpop.f32.mrf.mxu0
    %v327 = vadd.f32 0.0, %v326
    %v328 = vpop.f32.mrf.mxu0
    %329 = vdwg.mxu0
    %330 = vmatpush.bf16.msra.mxu0 %v270
    %331 = vmatpush.bf16.msra.mxu0 %v266
    %332 = vmatpush.bf16.msra.mxu0 %v262
    %333 = vmatpush.bf16.msra.mxu0 %v258
    %334 = vmatpush.bf16.msra.mxu0 %v254
    %335 = vmatpush.bf16.msra.mxu0 %v250
    %336 = vmatpush.bf16.msra.mxu0 %v246
    %337 = vmatpush.bf16.msra.mxu0 %v242
    %338 = vmatmul.bf16.gmra.mxu0 %v79
    %v339 = vpop.f32.mrf.mxu0
    %v340 = vadd.f32 0.0, %v339
    %v341 = vpop.f32.mrf.mxu0
    %342 = vdwg.mxu0
    %343 = vmatpush.bf16.msra.mxu0 %v271
    %344 = vmatpush.bf16.msra.mxu0 %v267
    %345 = vmatpush.bf16.msra.mxu0 %v263
    %346 = vmatpush.bf16.msra.mxu0 %v259
    %347 = vmatpush.bf16.msra.mxu0 %v255
    %348 = vmatpush.bf16.msra.mxu0 %v251
    %349 = vmatpush.bf16.msra.mxu0 %v247
    %350 = vmatpush.bf16.msra.mxu0 %v243
    %351 = vmatmul.bf16.gmra.mxu0 %v79
    %v352 = vpop.f32.mrf.mxu0
    %v353 = vadd.f32 0.0, %v352
    %v354 = vpop.f32.mrf.mxu0
    %355 = vdwg.mxu0
    %v388 = vunpack.c.l.b16 %v80
    %v389 = vunpack.c.h.b16 %v80
    %v390 = vunpack.c.l.b16 %v81
    %v391 = vunpack.c.h.b16 %v81
    %v392 = vunpack.c.l.b16 %v82
    %v393 = vunpack.c.h.b16 %v82
    %v394 = vunpack.c.l.b16 %v83
    %v395 = vunpack.c.h.b16 %v83
    %v396 = vunpack.c.l.b16 %v84
    %v397 = vunpack.c.h.b16 %v84
    %v398 = vunpack.c.l.b16 %v85
    %v399 = vunpack.c.h.b16 %v85
    %v400 = vunpack.c.l.b16 %v86
    %v401 = vunpack.c.h.b16 %v86
    %v402 = vunpack.c.l.b16 %v87
    %v403 = vunpack.c.h.b16 %v87
    %v404 = vunpack.c.l.b16 %v88
    %v405 = vunpack.c.h.b16 %v88
    %v406 = vunpack.c.l.b16 %v89
    %v407 = vunpack.c.h.b16 %v89
    %v408 = vunpack.c.l.b16 %v90
    %v409 = vunpack.c.h.b16 %v90
    %v410 = vunpack.c.l.b16 %v91
    %v411 = vunpack.c.h.b16 %v91
    %v412 = vunpack.c.l.b16 %v92
    %v413 = vunpack.c.h.b16 %v92
    %v414 = vunpack.c.l.b16 %v93
    %v415 = vunpack.c.h.b16 %v93
    %v416 = vunpack.c.l.b16 %v94
    %v417 = vunpack.c.h.b16 %v94
    %v418 = vunpack.c.l.b16 %v95
    %v419 = vunpack.c.h.b16 %v95
    %v420 = vunpack.c.l.b16 %v96
    %v421 = vunpack.c.h.b16 %v96
    %v422 = vunpack.c.l.b16 %v97
    %v423 = vunpack.c.h.b16 %v97
    %v424 = vunpack.c.l.b16 %v98
    %v425 = vunpack.c.h.b16 %v98
    %v426 = vunpack.c.l.b16 %v99
    %v427 = vunpack.c.h.b16 %v99
    %v428 = vunpack.c.l.b16 %v100
    %v429 = vunpack.c.h.b16 %v100
    %v430 = vunpack.c.l.b16 %v101
    %v431 = vunpack.c.h.b16 %v101
    %v432 = vunpack.c.l.b16 %v102
    %v433 = vunpack.c.h.b16 %v102
    %v434 = vunpack.c.l.b16 %v103
    %v435 = vunpack.c.h.b16 %v103
    %v436 = vunpack.c.l.b16 %v104
    %v437 = vunpack.c.h.b16 %v104
    %v438 = vunpack.c.l.b16 %v105
    %v439 = vunpack.c.h.b16 %v105
    %v440 = vunpack.c.l.b16 %v106
    %v441 = vunpack.c.h.b16 %v106
    %v442 = vunpack.c.l.b16 %v107
    %v443 = vunpack.c.h.b16 %v107
    %v444 = vunpack.c.l.b16 %v108
    %v445 = vunpack.c.h.b16 %v108
    %v446 = vunpack.c.l.b16 %v109
    %v447 = vunpack.c.h.b16 %v109
    %v448 = vunpack.c.l.b16 %v110
    %v449 = vunpack.c.h.b16 %v110
    %v450 = vunpack.c.l.b16 %v111
    %v451 = vunpack.c.h.b16 %v111
    %v452 = vpack.c.b16 %v392, %v388
    %v453 = vpack.c.b16 %v393, %v389
    %v454 = vpack.c.b16 %v394, %v390
    %v455 = vpack.c.b16 %v395, %v391
    %v456 = vpack.c.b16 %v400, %v396
    %v457 = vpack.c.b16 %v401, %v397
    %v458 = vpack.c.b16 %v402, %v398
    %v459 = vpack.c.b16 %v403, %v399
    %v460 = vpack.c.b16 %v408, %v404
    %v461 = vpack.c.b16 %v409, %v405
    %v462 = vpack.c.b16 %v410, %v406
    %v463 = vpack.c.b16 %v411, %v407
    %v464 = vpack.c.b16 %v416, %v412
    %v465 = vpack.c.b16 %v417, %v413
    %v466 = vpack.c.b16 %v418, %v414
    %v467 = vpack.c.b16 %v419, %v415
    %v468 = vpack.c.b16 %v424, %v420
    %v469 = vpack.c.b16 %v425, %v421
    %v470 = vpack.c.b16 %v426, %v422
    %v471 = vpack.c.b16 %v427, %v423
    %v472 = vpack.c.b16 %v432, %v428
    %v473 = vpack.c.b16 %v433, %v429
    %v474 = vpack.c.b16 %v434, %v430
    %v475 = vpack.c.b16 %v435, %v431
    %v476 = vpack.c.b16 %v440, %v436
    %v477 = vpack.c.b16 %v441, %v437
    %v478 = vpack.c.b16 %v442, %v438
    %v479 = vpack.c.b16 %v443, %v439
    %v480 = vpack.c.b16 %v448, %v444
    %v481 = vpack.c.b16 %v449, %v445
    %v482 = vpack.c.b16 %v450, %v446
    %v483 = vpack.c.b16 %v451, %v447
    %516 = vmatpush.bf16.msra.mxu0 %v480
    %517 = vmatpush.bf16.msra.mxu0 %v476
    %518 = vmatpush.bf16.msra.mxu0 %v472
    %519 = vmatpush.bf16.msra.mxu0 %v468
    %520 = vmatpush.bf16.msra.mxu0 %v464
    %521 = vmatpush.bf16.msra.mxu0 %v460
    %522 = vmatpush.bf16.msra.mxu0 %v456
    %523 = vmatpush.bf16.msra.mxu0 %v452
    %524 = vmatmul.bf16.gmra.mxu0 %v77
    %v525 = vpop.f32.mrf.mxu0
    %v526 = vadd.f32 %v314, %v525
    %v527 = vpop.f32.mrf.mxu0
    %528 = vdwg.mxu0
    %529 = vmatpush.bf16.msra.mxu0 %v481
    %530 = vmatpush.bf16.msra.mxu0 %v477
    %531 = vmatpush.bf16.msra.mxu0 %v473
    %532 = vmatpush.bf16.msra.mxu0 %v469
    %533 = vmatpush.bf16.msra.mxu0 %v465
    %534 = vmatpush.bf16.msra.mxu0 %v461
    %535 = vmatpush.bf16.msra.mxu0 %v457
    %536 = vmatpush.bf16.msra.mxu0 %v453
    %537 = vmatmul.bf16.gmra.mxu0 %v77
    %v538 = vpop.f32.mrf.mxu0
    %v539 = vadd.f32 %v327, %v538
    %v540 = vpop.f32.mrf.mxu0
    %541 = vdwg.mxu0
    %542 = vmatpush.bf16.msra.mxu0 %v482
    %543 = vmatpush.bf16.msra.mxu0 %v478
    %544 = vmatpush.bf16.msra.mxu0 %v474
    %545 = vmatpush.bf16.msra.mxu0 %v470
    %546 = vmatpush.bf16.msra.mxu0 %v466
    %547 = vmatpush.bf16.msra.mxu0 %v462
    %548 = vmatpush.bf16.msra.mxu0 %v458
    %549 = vmatpush.bf16.msra.mxu0 %v454
    %550 = vmatmul.bf16.gmra.mxu0 %v77
    %v551 = vpop.f32.mrf.mxu0
    %v552 = vadd.f32 %v340, %v551
    %v553 = vpop.f32.mrf.mxu0
    %554 = vdwg.mxu0
    %555 = vmatpush.bf16.msra.mxu0 %v483
    %556 = vmatpush.bf16.msra.mxu0 %v479
    %557 = vmatpush.bf16.msra.mxu0 %v475
    %558 = vmatpush.bf16.msra.mxu0 %v471
    %559 = vmatpush.bf16.msra.mxu0 %v467
    %560 = vmatpush.bf16.msra.mxu0 %v463
    %561 = vmatpush.bf16.msra.mxu0 %v459
    %562 = vmatpush.bf16.msra.mxu0 %v455
    %563 = vmatmul.bf16.gmra.mxu0 %v77
    %v564 = vpop.f32.mrf.mxu0
    %v565 = vadd.f32 %v353, %v564
    %v566 = vpop.f32.mrf.mxu0
    %567 = vdwg.mxu0
    %v568 = vld [vmem:[%s4] sm:$0xf]
    %v570 = vperm.slane %v568, 0
    %v571 = vperm.slane %v568, 1
    %v572 = vperm.slane %v568, 2
    %v573 = vperm.slane %v568, 3
    %v578 = vadd.f32 %v526, %v570
    %v579 = vadd.f32 %v539, %v571
    %v580 = vadd.f32 %v552, %v572
    %v581 = vadd.f32 %v565, %v573
    %v582 = vxor.u32 %v578, 2147483648
    %v583 = vxor.u32 %v579, 2147483648
    %v584 = vmul.f32 %v582, 1.442695
    %v585 = vpow.pop %v584
    %v586 = vmul.f32 %v583, 1.442695
    %v587 = vpow.pop %v586
    %v588 = vadd.f32 %v585, 1.0
    %v589 = vadd.f32 %v587, 1.0
    %v590 = vrcp.pop %v588
    %v591 = vmul.f32 %v588, %v590
    %v592 = vsub.f32 1.0, %v591
    %v593 = vmul.f32 %v590, %v592
    %v594 = vadd.f32 %v590, %v593
    %vm595 = vweird.f32 %v588
    %vm596 = vweird.f32 %v590
    %vm597 = vmor %vm595, %vm596
    %v598 = vsel %vm597, %v590, %v594
    %v599 = vand.u32 2147483647, %v588
    %vm600 = vcmp.eq.f32.partialorder %v599, 8.507059e+37
    %v601 = vand.u32 %v588, 2147483648
    %v602 = vor.u32 1.1754944e-38, %v601
    %v603 = vsel %vm600, %v602, %v598
    %v604 = vmul.f32 1.0, %v603
    %v605 = vrcp.pop %v589
    %v606 = vmul.f32 %v589, %v605
    %v607 = vsub.f32 1.0, %v606
    %v608 = vmul.f32 %v605, %v607
    %v609 = vadd.f32 %v605, %v608
    %vm610 = vweird.f32 %v589
    %vm611 = vweird.f32 %v605
    %vm612 = vmor %vm610, %vm611
    %v613 = vsel %vm612, %v605, %v609
    %v614 = vand.u32 2147483647, %v589
    %vm615 = vcmp.eq.f32.partialorder %v614, 8.507059e+37
    %v616 = vand.u32 %v589, 2147483648
    %v617 = vor.u32 1.1754944e-38, %v616
    %v618 = vsel %vm615, %v617, %v613
    %v619 = vmul.f32 1.0, %v618
    %v620 = vmul.f32 %v604, %v581
    %v621 = vadd.f32 %v580, %v620
    %v622 = vtanh.pop %v621
    %v623 = vsub.f32 1.0, %v619
    %v624 = vmul.f32 %v623, %v622
    %v625 = vmul.f32 %v619, %v78
    %v626 = vadd.f32 %v624, %v625
    %627 = vst [vmem:[%s8] sm:$0xff] %v626
    %v628 = vpack.c.bf16 %v626, %v626
    %s629 = scalar_lea.vmem %s1, 8
    %v630 = vld [vmem:[%s629] sm:$0xff]
    %v631 = vpack.c.bf16 %v630, %v630
    %v632 = vld [vmem:[#allocation5] sm:$0xff]
    %v633 = vld [vmem:[#allocation5 + $0x8] sm:$0xff]
    %v634 = vld [vmem:[#allocation5 + $0x10] sm:$0xff]
    %v635 = vld [vmem:[#allocation5 + $0x18] sm:$0xff]
    %v636 = vld [vmem:[#allocation5 + $0x20] sm:$0xff]
    %v637 = vld [vmem:[#allocation5 + $0x28] sm:$0xff]
    %v638 = vld [vmem:[#allocation5 + $0x30] sm:$0xff]
    %v639 = vld [vmem:[#allocation5 + $0x38] sm:$0xff]
    %v640 = vld [vmem:[#allocation5 + $0x40] sm:$0xff]
    %v641 = vld [vmem:[#allocation5 + $0x48] sm:$0xff]
    %v642 = vld [vmem:[#allocation5 + $0x50] sm:$0xff]
    %v643 = vld [vmem:[#allocation5 + $0x58] sm:$0xff]
    %v644 = vld [vmem:[#allocation5 + $0x60] sm:$0xff]
    %v645 = vld [vmem:[#allocation5 + $0x68] sm:$0xff]
    %v646 = vld [vmem:[#allocation5 + $0x70] sm:$0xff]
    %v647 = vld [vmem:[#allocation5 + $0x78] sm:$0xff]
    %v648 = vld [vmem:[#allocation5 + $0x80] sm:$0xff]
    %v649 = vld [vmem:[#allocation5 + $0x88] sm:$0xff]
    %v650 = vld [vmem:[#allocation5 + $0x90] sm:$0xff]
    %v651 = vld [vmem:[#allocation5 + $0x98] sm:$0xff]
    %v652 = vld [vmem:[#allocation5 + $0xa0] sm:$0xff]
    %v653 = vld [vmem:[#allocation5 + $0xa8] sm:$0xff]
    %v654 = vld [vmem:[#allocation5 + $0xb0] sm:$0xff]
    %v655 = vld [vmem:[#allocation5 + $0xb8] sm:$0xff]
    %v656 = vld [vmem:[#allocation5 + $0xc0] sm:$0xff]
    %v657 = vld [vmem:[#allocation5 + $0xc8] sm:$0xff]
    %v658 = vld [vmem:[#allocation5 + $0xd0] sm:$0xff]
    %v659 = vld [vmem:[#allocation5 + $0xd8] sm:$0xff]
    %v660 = vld [vmem:[#allocation5 + $0xe0] sm:$0xff]
    %v661 = vld [vmem:[#allocation5 + $0xe8] sm:$0xff]
    %v662 = vld [vmem:[#allocation5 + $0xf0] sm:$0xff]
    %v663 = vld [vmem:[#allocation5 + $0xf8] sm:$0xff]
    %v664 = vld [vmem:[#allocation5 + $0x100] sm:$0xff]
    %v665 = vld [vmem:[#allocation5 + $0x108] sm:$0xff]
    %v666 = vld [vmem:[#allocation5 + $0x110] sm:$0xff]
    %v667 = vld [vmem:[#allocation5 + $0x118] sm:$0xff]
    %v668 = vld [vmem:[#allocation5 + $0x120] sm:$0xff]
    %v669 = vld [vmem:[#allocation5 + $0x128] sm:$0xff]
    %v670 = vld [vmem:[#allocation5 + $0x130] sm:$0xff]
    %v671 = vld [vmem:[#allocation5 + $0x138] sm:$0xff]
    %v672 = vld [vmem:[#allocation5 + $0x140] sm:$0xff]
    %v673 = vld [vmem:[#allocation5 + $0x148] sm:$0xff]
    %v674 = vld [vmem:[#allocation5 + $0x150] sm:$0xff]
    %v675 = vld [vmem:[#allocation5 + $0x158] sm:$0xff]
    %v676 = vld [vmem:[#allocation5 + $0x160] sm:$0xff]
    %v677 = vld [vmem:[#allocation5 + $0x168] sm:$0xff]
    %v678 = vld [vmem:[#allocation5 + $0x170] sm:$0xff]
    %v679 = vld [vmem:[#allocation5 + $0x178] sm:$0xff]
    %v680 = vld [vmem:[#allocation5 + $0x180] sm:$0xff]
    %v681 = vld [vmem:[#allocation5 + $0x188] sm:$0xff]
    %v682 = vld [vmem:[#allocation5 + $0x190] sm:$0xff]
    %v683 = vld [vmem:[#allocation5 + $0x198] sm:$0xff]
    %v684 = vld [vmem:[#allocation5 + $0x1a0] sm:$0xff]
    %v685 = vld [vmem:[#allocation5 + $0x1a8] sm:$0xff]
    %v686 = vld [vmem:[#allocation5 + $0x1b0] sm:$0xff]
    %v687 = vld [vmem:[#allocation5 + $0x1b8] sm:$0xff]
    %v688 = vld [vmem:[#allocation5 + $0x1c0] sm:$0xff]
    %v689 = vld [vmem:[#allocation5 + $0x1c8] sm:$0xff]
    %v690 = vld [vmem:[#allocation5 + $0x1d0] sm:$0xff]
    %v691 = vld [vmem:[#allocation5 + $0x1d8] sm:$0xff]
    %v692 = vld [vmem:[#allocation5 + $0x1e0] sm:$0xff]
    %v693 = vld [vmem:[#allocation5 + $0x1e8] sm:$0xff]
    %v694 = vld [vmem:[#allocation5 + $0x1f0] sm:$0xff]
    %v695 = vld [vmem:[#allocation5 + $0x1f8] sm:$0xff]
    %v728 = vunpack.c.l.b16 %v664
    %v729 = vunpack.c.h.b16 %v664
    %v730 = vunpack.c.l.b16 %v665
    %v731 = vunpack.c.h.b16 %v665
    %v732 = vunpack.c.l.b16 %v666
    %v733 = vunpack.c.h.b16 %v666
    %v734 = vunpack.c.l.b16 %v667
    %v735 = vunpack.c.h.b16 %v667
    %v736 = vunpack.c.l.b16 %v668
    %v737 = vunpack.c.h.b16 %v668
    %v738 = vunpack.c.l.b16 %v669
    %v739 = vunpack.c.h.b16 %v669
    %v740 = vunpack.c.l.b16 %v670
    %v741 = vunpack.c.h.b16 %v670
    %v742 = vunpack.c.l.b16 %v671
    %v743 = vunpack.c.h.b16 %v671
    %v744 = vunpack.c.l.b16 %v672
    %v745 = vunpack.c.h.b16 %v672
    %v746 = vunpack.c.l.b16 %v673
    %v747 = vunpack.c.h.b16 %v673
    %v748 = vunpack.c.l.b16 %v674
    %v749 = vunpack.c.h.b16 %v674
    %v750 = vunpack.c.l.b16 %v675
    %v751 = vunpack.c.h.b16 %v675
    %v752 = vunpack.c.l.b16 %v676
    %v753 = vunpack.c.h.b16 %v676
    %v754 = vunpack.c.l.b16 %v677
    %v755 = vunpack.c.h.b16 %v677
    %v756 = vunpack.c.l.b16 %v678
    %v757 = vunpack.c.h.b16 %v678
    %v758 = vunpack.c.l.b16 %v679
    %v759 = vunpack.c.h.b16 %v679
    %v760 = vunpack.c.l.b16 %v680
    %v761 = vunpack.c.h.b16 %v680
    %v762 = vunpack.c.l.b16 %v681
    %v763 = vunpack.c.h.b16 %v681
    %v764 = vunpack.c.l.b16 %v682
    %v765 = vunpack.c.h.b16 %v682
    %v766 = vunpack.c.l.b16 %v683
    %v767 = vunpack.c.h.b16 %v683
    %v768 = vunpack.c.l.b16 %v684
    %v769 = vunpack.c.h.b16 %v684
    %v770 = vunpack.c.l.b16 %v685
    %v771 = vunpack.c.h.b16 %v685
    %v772 = vunpack.c.l.b16 %v686
    %v773 = vunpack.c.h.b16 %v686
    %v774 = vunpack.c.l.b16 %v687
    %v775 = vunpack.c.h.b16 %v687
    %v776 = vunpack.c.l.b16 %v688
    %v777 = vunpack.c.h.b16 %v688
    %v778 = vunpack.c.l.b16 %v689
    %v779 = vunpack.c.h.b16 %v689
    %v780 = vunpack.c.l.b16 %v690
    %v781 = vunpack.c.h.b16 %v690
    %v782 = vunpack.c.l.b16 %v691
    %v783 = vunpack.c.h.b16 %v691
    %v784 = vunpack.c.l.b16 %v692
    %v785 = vunpack.c.h.b16 %v692
    %v786 = vunpack.c.l.b16 %v693
    %v787 = vunpack.c.h.b16 %v693
    %v788 = vunpack.c.l.b16 %v694
    %v789 = vunpack.c.h.b16 %v694
    %v790 = vunpack.c.l.b16 %v695
    %v791 = vunpack.c.h.b16 %v695
    %v792 = vpack.c.b16 %v732, %v728
    %v793 = vpack.c.b16 %v733, %v729
    %v794 = vpack.c.b16 %v734, %v730
    %v795 = vpack.c.b16 %v735, %v731
    %v796 = vpack.c.b16 %v740, %v736
    %v797 = vpack.c.b16 %v741, %v737
    %v798 = vpack.c.b16 %v742, %v738
    %v799 = vpack.c.b16 %v743, %v739
    %v800 = vpack.c.b16 %v748, %v744
    %v801 = vpack.c.b16 %v749, %v745
    %v802 = vpack.c.b16 %v750, %v746
    %v803 = vpack.c.b16 %v751, %v747
    %v804 = vpack.c.b16 %v756, %v752
    %v805 = vpack.c.b16 %v757, %v753
    %v806 = vpack.c.b16 %v758, %v754
    %v807 = vpack.c.b16 %v759, %v755
    %v808 = vpack.c.b16 %v764, %v760
    %v809 = vpack.c.b16 %v765, %v761
    %v810 = vpack.c.b16 %v766, %v762
    %v811 = vpack.c.b16 %v767, %v763
    %v812 = vpack.c.b16 %v772, %v768
    %v813 = vpack.c.b16 %v773, %v769
    %v814 = vpack.c.b16 %v774, %v770
    %v815 = vpack.c.b16 %v775, %v771
    %v816 = vpack.c.b16 %v780, %v776
    %v817 = vpack.c.b16 %v781, %v777
    %v818 = vpack.c.b16 %v782, %v778
    %v819 = vpack.c.b16 %v783, %v779
    %v820 = vpack.c.b16 %v788, %v784
    %v821 = vpack.c.b16 %v789, %v785
    %v822 = vpack.c.b16 %v790, %v786
    %v823 = vpack.c.b16 %v791, %v787
    %856 = vmatpush.bf16.msra.mxu0 %v820
    %857 = vmatpush.bf16.msra.mxu0 %v816
    %858 = vmatpush.bf16.msra.mxu0 %v812
    %859 = vmatpush.bf16.msra.mxu0 %v808
    %860 = vmatpush.bf16.msra.mxu0 %v804
    %861 = vmatpush.bf16.msra.mxu0 %v800
    %862 = vmatpush.bf16.msra.mxu0 %v796
    %863 = vmatpush.bf16.msra.mxu0 %v792
    %864 = vmatmul.bf16.gmra.mxu0 %v631
    %v865 = vpop.f32.mrf.mxu0
    %v866 = vadd.f32 0.0, %v865
    %v867 = vpop.f32.mrf.mxu0
    %868 = vdwg.mxu0
    %869 = vmatpush.bf16.msra.mxu0 %v821
    %870 = vmatpush.bf16.msra.mxu0 %v817
    %871 = vmatpush.bf16.msra.mxu0 %v813
    %872 = vmatpush.bf16.msra.mxu0 %v809
    %873 = vmatpush.bf16.msra.mxu0 %v805
    %874 = vmatpush.bf16.msra.mxu0 %v801
    %875 = vmatpush.bf16.msra.mxu0 %v797
    %876 = vmatpush.bf16.msra.mxu0 %v793
    %877 = vmatmul.bf16.gmra.mxu0 %v631
    %v878 = vpop.f32.mrf.mxu0
    %v879 = vadd.f32 0.0, %v878
    %v880 = vpop.f32.mrf.mxu0
    %881 = vdwg.mxu0
    %882 = vmatpush.bf16.msra.mxu0 %v822
    %883 = vmatpush.bf16.msra.mxu0 %v818
    %884 = vmatpush.bf16.msra.mxu0 %v814
    %885 = vmatpush.bf16.msra.mxu0 %v810
    %886 = vmatpush.bf16.msra.mxu0 %v806
    %887 = vmatpush.bf16.msra.mxu0 %v802
    %888 = vmatpush.bf16.msra.mxu0 %v798
    %889 = vmatpush.bf16.msra.mxu0 %v794
    %890 = vmatmul.bf16.gmra.mxu0 %v631
    %v891 = vpop.f32.mrf.mxu0
    %v892 = vadd.f32 0.0, %v891
    %v893 = vpop.f32.mrf.mxu0
    %894 = vdwg.mxu0
    %895 = vmatpush.bf16.msra.mxu0 %v823
    %896 = vmatpush.bf16.msra.mxu0 %v819
    %897 = vmatpush.bf16.msra.mxu0 %v815
    %898 = vmatpush.bf16.msra.mxu0 %v811
    %899 = vmatpush.bf16.msra.mxu0 %v807
    %900 = vmatpush.bf16.msra.mxu0 %v803
    %901 = vmatpush.bf16.msra.mxu0 %v799
    %902 = vmatpush.bf16.msra.mxu0 %v795
    %903 = vmatmul.bf16.gmra.mxu0 %v631
    %v904 = vpop.f32.mrf.mxu0
    %v905 = vadd.f32 0.0, %v904
    %v906 = vpop.f32.mrf.mxu0
    %907 = vdwg.mxu0
    %v940 = vunpack.c.l.b16 %v632
    %v941 = vunpack.c.h.b16 %v632
    %v942 = vunpack.c.l.b16 %v633
    %v943 = vunpack.c.h.b16 %v633
    %v944 = vunpack.c.l.b16 %v634
    %v945 = vunpack.c.h.b16 %v634
    %v946 = vunpack.c.l.b16 %v635
    %v947 = vunpack.c.h.b16 %v635
    %v948 = vunpack.c.l.b16 %v636
    %v949 = vunpack.c.h.b16 %v636
    %v950 = vunpack.c.l.b16 %v637
    %v951 = vunpack.c.h.b16 %v637
    %v952 = vunpack.c.l.b16 %v638
    %v953 = vunpack.c.h.b16 %v638
    %v954 = vunpack.c.l.b16 %v639
    %v955 = vunpack.c.h.b16 %v639
    %v956 = vunpack.c.l.b16 %v640
    %v957 = vunpack.c.h.b16 %v640
    %v958 = vunpack.c.l.b16 %v641
    %v959 = vunpack.c.h.b16 %v641
    %v960 = vunpack.c.l.b16 %v642
    %v961 = vunpack.c.h.b16 %v642
    %v962 = vunpack.c.l.b16 %v643
    %v963 = vunpack.c.h.b16 %v643
    %v964 = vunpack.c.l.b16 %v644
    %v965 = vunpack.c.h.b16 %v644
    %v966 = vunpack.c.l.b16 %v645
    %v967 = vunpack.c.h.b16 %v645
    %v968 = vunpack.c.l.b16 %v646
    %v969 = vunpack.c.h.b16 %v646
    %v970 = vunpack.c.l.b16 %v647
    %v971 = vunpack.c.h.b16 %v647
    %v972 = vunpack.c.l.b16 %v648
    %v973 = vunpack.c.h.b16 %v648
    %v974 = vunpack.c.l.b16 %v649
    %v975 = vunpack.c.h.b16 %v649
    %v976 = vunpack.c.l.b16 %v650
    %v977 = vunpack.c.h.b16 %v650
    %v978 = vunpack.c.l.b16 %v651
    %v979 = vunpack.c.h.b16 %v651
    %v980 = vunpack.c.l.b16 %v652
    %v981 = vunpack.c.h.b16 %v652
    %v982 = vunpack.c.l.b16 %v653
    %v983 = vunpack.c.h.b16 %v653
    %v984 = vunpack.c.l.b16 %v654
    %v985 = vunpack.c.h.b16 %v654
    %v986 = vunpack.c.l.b16 %v655
    %v987 = vunpack.c.h.b16 %v655
    %v988 = vunpack.c.l.b16 %v656
    %v989 = vunpack.c.h.b16 %v656
    %v990 = vunpack.c.l.b16 %v657
    %v991 = vunpack.c.h.b16 %v657
    %v992 = vunpack.c.l.b16 %v658
    %v993 = vunpack.c.h.b16 %v658
    %v994 = vunpack.c.l.b16 %v659
    %v995 = vunpack.c.h.b16 %v659
    %v996 = vunpack.c.l.b16 %v660
    %v997 = vunpack.c.h.b16 %v660
    %v998 = vunpack.c.l.b16 %v661
    %v999 = vunpack.c.h.b16 %v661
    %v1000 = vunpack.c.l.b16 %v662
    %v1001 = vunpack.c.h.b16 %v662
    %v1002 = vunpack.c.l.b16 %v663
    %v1003 = vunpack.c.h.b16 %v663
    %v1004 = vpack.c.b16 %v944, %v940
    %v1005 = vpack.c.b16 %v945, %v941
    %v1006 = vpack.c.b16 %v946, %v942
    %v1007 = vpack.c.b16 %v947, %v943
    %v1008 = vpack.c.b16 %v952, %v948
    %v1009 = vpack.c.b16 %v953, %v949
    %v1010 = vpack.c.b16 %v954, %v950
    %v1011 = vpack.c.b16 %v955, %v951
    %v1012 = vpack.c.b16 %v960, %v956
    %v1013 = vpack.c.b16 %v961, %v957
    %v1014 = vpack.c.b16 %v962, %v958
    %v1015 = vpack.c.b16 %v963, %v959
    %v1016 = vpack.c.b16 %v968, %v964
    %v1017 = vpack.c.b16 %v969, %v965
    %v1018 = vpack.c.b16 %v970, %v966
    %v1019 = vpack.c.b16 %v971, %v967
    %v1020 = vpack.c.b16 %v976, %v972
    %v1021 = vpack.c.b16 %v977, %v973
    %v1022 = vpack.c.b16 %v978, %v974
    %v1023 = vpack.c.b16 %v979, %v975
    %v1024 = vpack.c.b16 %v984, %v980
    %v1025 = vpack.c.b16 %v985, %v981
    %v1026 = vpack.c.b16 %v986, %v982
    %v1027 = vpack.c.b16 %v987, %v983
    %v1028 = vpack.c.b16 %v992, %v988
    %v1029 = vpack.c.b16 %v993, %v989
    %v1030 = vpack.c.b16 %v994, %v990
    %v1031 = vpack.c.b16 %v995, %v991
    %v1032 = vpack.c.b16 %v1000, %v996
    %v1033 = vpack.c.b16 %v1001, %v997
    %v1034 = vpack.c.b16 %v1002, %v998
    %v1035 = vpack.c.b16 %v1003, %v999
    %1068 = vmatpush.bf16.msra.mxu0 %v1032
    %1069 = vmatpush.bf16.msra.mxu0 %v1028
    %1070 = vmatpush.bf16.msra.mxu0 %v1024
    %1071 = vmatpush.bf16.msra.mxu0 %v1020
    %1072 = vmatpush.bf16.msra.mxu0 %v1016
    %1073 = vmatpush.bf16.msra.mxu0 %v1012
    %1074 = vmatpush.bf16.msra.mxu0 %v1008
    %1075 = vmatpush.bf16.msra.mxu0 %v1004
    %1076 = vmatmul.bf16.gmra.mxu0 %v628
    %v1077 = vpop.f32.mrf.mxu0
    %v1078 = vadd.f32 %v866, %v1077
    %v1079 = vpop.f32.mrf.mxu0
    %1080 = vdwg.mxu0
    %1081 = vmatpush.bf16.msra.mxu0 %v1033
    %1082 = vmatpush.bf16.msra.mxu0 %v1029
    %1083 = vmatpush.bf16.msra.mxu0 %v1025
    %1084 = vmatpush.bf16.msra.mxu0 %v1021
    %1085 = vmatpush.bf16.msra.mxu0 %v1017
    %1086 = vmatpush.bf16.msra.mxu0 %v1013
    %1087 = vmatpush.bf16.msra.mxu0 %v1009
    %1088 = vmatpush.bf16.msra.mxu0 %v1005
    %1089 = vmatmul.bf16.gmra.mxu0 %v628
    %v1090 = vpop.f32.mrf.mxu0
    %v1091 = vadd.f32 %v879, %v1090
    %v1092 = vpop.f32.mrf.mxu0
    %1093 = vdwg.mxu0
    %1094 = vmatpush.bf16.msra.mxu0 %v1034
    %1095 = vmatpush.bf16.msra.mxu0 %v1030
    %1096 = vmatpush.bf16.msra.mxu0 %v1026
    %1097 = vmatpush.bf16.msra.mxu0 %v1022
    %1098 = vmatpush.bf16.msra.mxu0 %v1018
    %1099 = vmatpush.bf16.msra.mxu0 %v1014
    %1100 = vmatpush.bf16.msra.mxu0 %v1010
    %1101 = vmatpush.bf16.msra.mxu0 %v1006
    %1102 = vmatmul.bf16.gmra.mxu0 %v628
    %v1103 = vpop.f32.mrf.mxu0
    %v1104 = vadd.f32 %v892, %v1103
    %v1105 = vpop.f32.mrf.mxu0
    %1106 = vdwg.mxu0
    %1107 = vmatpush.bf16.msra.mxu0 %v1035
    %1108 = vmatpush.bf16.msra.mxu0 %v1031
    %1109 = vmatpush.bf16.msra.mxu0 %v1027
    %1110 = vmatpush.bf16.msra.mxu0 %v1023
    %1111 = vmatpush.bf16.msra.mxu0 %v1019
    %1112 = vmatpush.bf16.msra.mxu0 %v1015
    %1113 = vmatpush.bf16.msra.mxu0 %v1011
    %1114 = vmatpush.bf16.msra.mxu0 %v1007
    %1115 = vmatmul.bf16.gmra.mxu0 %v628
    %v1116 = vpop.f32.mrf.mxu0
    %v1117 = vadd.f32 %v905, %v1116
    %v1118 = vpop.f32.mrf.mxu0
    %1119 = vdwg.mxu0
    %s1120 = scalar_lea.vmem %s4, 4
    %v1121 = vld [vmem:[%s1120] sm:$0xf]
    %v1123 = vperm.slane %v1121, 0
    %v1124 = vperm.slane %v1121, 1
    %v1125 = vperm.slane %v1121, 2
    %v1126 = vperm.slane %v1121, 3
    %v1131 = vadd.f32 %v1078, %v1123
    %v1132 = vadd.f32 %v1091, %v1124
    %v1133 = vadd.f32 %v1104, %v1125
    %v1134 = vadd.f32 %v1117, %v1126
    %v1135 = vxor.u32 %v1131, 2147483648
    %v1136 = vxor.u32 %v1132, 2147483648
    %v1137 = vmul.f32 %v1135, 1.442695
    %v1138 = vpow.pop %v1137
    %v1139 = vmul.f32 %v1136, 1.442695
    %v1140 = vpow.pop %v1139
    %v1141 = vadd.f32 %v1138, 1.0
    %v1142 = vadd.f32 %v1140, 1.0
    %v1143 = vrcp.pop %v1141
    %v1144 = vmul.f32 %v1141, %v1143
    %v1145 = vsub.f32 1.0, %v1144
    %v1146 = vmul.f32 %v1143, %v1145
    %v1147 = vadd.f32 %v1143, %v1146
    %vm1148 = vweird.f32 %v1141
    %vm1149 = vweird.f32 %v1143
    %vm1150 = vmor %vm1148, %vm1149
    %v1151 = vsel %vm1150, %v1143, %v1147
    %v1152 = vand.u32 2147483647, %v1141
    %vm1153 = vcmp.eq.f32.partialorder %v1152, 8.507059e+37
    %v1154 = vand.u32 %v1141, 2147483648
    %v1155 = vor.u32 1.1754944e-38, %v1154
    %v1156 = vsel %vm1153, %v1155, %v1151
    %v1157 = vmul.f32 1.0, %v1156
    %v1158 = vrcp.pop %v1142
    %v1159 = vmul.f32 %v1142, %v1158
    %v1160 = vsub.f32 1.0, %v1159
    %v1161 = vmul.f32 %v1158, %v1160
    %v1162 = vadd.f32 %v1158, %v1161
    %vm1163 = vweird.f32 %v1142
    %vm1164 = vweird.f32 %v1158
    %vm1165 = vmor %vm1163, %vm1164
    %v1166 = vsel %vm1165, %v1158, %v1162
    %v1167 = vand.u32 2147483647, %v1142
    %vm1168 = vcmp.eq.f32.partialorder %v1167, 8.507059e+37
    %v1169 = vand.u32 %v1142, 2147483648
    %v1170 = vor.u32 1.1754944e-38, %v1169
    %v1171 = vsel %vm1168, %v1170, %v1166
    %v1172 = vmul.f32 1.0, %v1171
    %v1173 = vmul.f32 %v1157, %v1134
    %v1174 = vadd.f32 %v1133, %v1173
    %v1175 = vtanh.pop %v1174
    %v1176 = vsub.f32 1.0, %v1172
    %v1177 = vmul.f32 %v1176, %v1175
    %v1178 = vmul.f32 %v1172, %v630
    %v1179 = vadd.f32 %v1177, %v1178
    %s1180 = scalar_lea.vmem %s8, 8
    %1181 = vst [vmem:[%s1180] sm:$0xff] %v1179
    %v1182 = vpack.c.bf16 %v1179, %v1179
    %v1183 = vld [vmem:[#allocation7] sm:$0xf]
    %v1184 = vld [vmem:[#allocation7 + $0x4] sm:$0xf]
    %v1185 = vld [vmem:[#allocation7 + $0x8] sm:$0xf]
    %v1186 = vld [vmem:[#allocation7 + $0xc] sm:$0xf]
    %v1187 = vld [vmem:[#allocation7 + $0x10] sm:$0xf]
    %v1188 = vld [vmem:[#allocation7 + $0x14] sm:$0xf]
    %v1189 = vld [vmem:[#allocation7 + $0x18] sm:$0xf]
    %v1190 = vld [vmem:[#allocation7 + $0x1c] sm:$0xf]
    %v1191 = vld [vmem:[#allocation7 + $0x20] sm:$0xf]
    %v1192 = vld [vmem:[#allocation7 + $0x24] sm:$0xf]
    %v1193 = vld [vmem:[#allocation7 + $0x28] sm:$0xf]
    %v1194 = vld [vmem:[#allocation7 + $0x2c] sm:$0xf]
    %v1195 = vld [vmem:[#allocation7 + $0x30] sm:$0xf]
    %v1196 = vld [vmem:[#allocation7 + $0x34] sm:$0xf]
    %v1197 = vld [vmem:[#allocation7 + $0x38] sm:$0xf]
    %v1198 = vld [vmem:[#allocation7 + $0x3c] sm:$0xf]
    %v1199 = vld [vmem:[%s6] sm:$0x1]
    %v1201 = vperm.slane %v1199, 0
    %v1219 = vunpack.c.l.b16 %v1183
    %v1220 = vunpack.c.l.b16 %v1184
    %v1221 = vunpack.c.l.b16 %v1185
    %v1222 = vunpack.c.l.b16 %v1186
    %v1223 = vunpack.c.l.b16 %v1187
    %v1224 = vunpack.c.l.b16 %v1188
    %v1225 = vunpack.c.l.b16 %v1189
    %v1226 = vunpack.c.l.b16 %v1190
    %v1227 = vunpack.c.l.b16 %v1191
    %v1228 = vunpack.c.l.b16 %v1192
    %v1229 = vunpack.c.l.b16 %v1193
    %v1230 = vunpack.c.l.b16 %v1194
    %v1231 = vunpack.c.l.b16 %v1195
    %v1232 = vunpack.c.l.b16 %v1196
    %v1233 = vunpack.c.l.b16 %v1197
    %v1234 = vunpack.c.l.b16 %v1198
    %v1235 = vpack.c.b16 %v1220, %v1219
    %v1236 = vpack.c.b16 %v1222, %v1221
    %v1237 = vpack.c.b16 %v1224, %v1223
    %v1238 = vpack.c.b16 %v1226, %v1225
    %v1239 = vpack.c.b16 %v1228, %v1227
    %v1240 = vpack.c.b16 %v1230, %v1229
    %v1241 = vpack.c.b16 %v1232, %v1231
    %v1242 = vpack.c.b16 %v1234, %v1233
    %1251 = vmatpush.bf16.msra.mxu0 %v1242
    %1252 = vmatpush.bf16.msra.mxu0 %v1241
    %1253 = vmatpush.bf16.msra.mxu0 %v1240
    %1254 = vmatpush.bf16.msra.mxu0 %v1239
    %1255 = vmatpush.bf16.msra.mxu0 %v1238
    %1256 = vmatpush.bf16.msra.mxu0 %v1237
    %1257 = vmatpush.bf16.msra.mxu0 %v1236
    %1258 = vmatpush.bf16.msra.mxu0 %v1235
    %1259 = vmatmul.bf16.gmra.mxu0 %v1182
    %v1260 = vpop.f32.mrf.mxu0
    %v1261 = vadd.f32 %v1201, %v1260
    %v1262 = vpop.f32.mrf.mxu0
    %1263 = vdwg.mxu0
    %1264 = vst [vmem:[#allocation8] sm:$0xff] %v1261
    // Predicated region
    $region42: #{a_call__.1} parent=1 // pred_check
      _
    $region43: #{a_call__.1} parent=1 // pred_check_branch
      %1266 = sbr.rel (0) target = $region45
    $region44: #{a_call__.1} parent=1 // pred_region
      %1268 = vsyncadd [#allocation4], 0
      %s1270 = sshll.u32 [#allocation8], 4
      %s1271 = int_to_ptr.vmem [resolvable:$true] %s1270
      %s1272 = sshll.u32 %s7, 4
      %s1273 = int_to_ptr.hbm [resolvable:$true] %s1272
      %1275 = dma.vmem_to_hbm [thread:$0]  %s1271, 128, %s1273, [#allocation4]
    $region45: #{a_call__.1} parent=1 // pred_fallthru
      _
    // Predicated region
    $region46: #{a_call__.1} parent=1 // pred_check
      _
    $region47: #{a_call__.1} parent=1 // pred_check_branch
      %1277 = sbr.rel (0) target = $region49
    $region48: #{a_call__.1} parent=1 // pred_region
      _
    $region49: #{a_call__.1} parent=1 // pred_fallthru
      _
    // Predicated region
    $region50: #{a_call__.1} parent=1 // pred_check
      _
    $region51: #{a_call__.1} parent=1 // pred_check_branch
      %1279 = sbr.rel (0) target = $region53
    $region52: #{a_call__.1} parent=1 // pred_region
      %1281 = dma.done [#allocation4], 128
    $region53: #{a_call__.1} parent=1 // pred_fallthru
      _
    // Predicated region
    $region54: #{a_call__.1} parent=1 // pred_check
      _
    $region55: #{a_call__.1} parent=1 // pred_check_branch
      %1283 = sbr.rel (0) target = $region57
    $region56: #{a_call__.1} parent=1 // pred_region
      _
    $region57: #{a_call__.1} parent=1 // pred_fallthru
      _
    %1284 = vsyncpa [#allocation3], 1
    %1285 = vsyncpa [#allocation6], 1
    %1286 = vsyncpa [#allocation4], 1

</llo_original>
